<compile_context>
chip_gen: v7x
topology: tpu7x:2x2x1
jax: 0.10.0
libtpu: 0.0.40
codegen_flags: <defaults>
</compile_context>

<pallas_src>
import math

import jax
import jax.numpy as jnp
from jax.experimental import pallas as pl
from jax.experimental.pallas import tpu as pltpu


# --------------------------- projection MLP (one-shot prologue) ---------------------------

def _mlp_kernel(x_ref, w1_ref, b1_ref, w2_ref, b2_ref, y_ref):
    """y = ReLU(x @ W1 + b1) @ W2 + b2, computed once on the whole (tiny) batch."""
    h = jnp.dot(x_ref[...], w1_ref[...], preferred_element_type=jnp.float32)
    h = jnp.maximum(h + b1_ref[...], 0.0)
    y = jnp.dot(h, w2_ref[...], preferred_element_type=jnp.float32) + b2_ref[...]
    y_ref[...] = y.astype(y_ref.dtype)


def _project(text_feat, w1, b1, w2, b2):
    B, text_dim = text_feat.shape
    proj_dim = w2.shape[1]
    vmem = pl.BlockSpec(memory_space=pltpu.MemorySpace.VMEM)
    return pl.pallas_call(
        _mlp_kernel,
        out_shape=jax.ShapeDtypeStruct((B, proj_dim), jnp.float32),
        in_specs=[vmem, vmem, vmem, vmem, vmem],
        out_specs=vmem,
        cost_estimate=pl.CostEstimate(
            flops=2 * B * (text_dim + proj_dim) * proj_dim,
            transcendentals=0,
            bytes_accessed=4 * (B * text_dim + text_dim * proj_dim
                                + proj_dim * proj_dim + 2 * proj_dim + B * proj_dim)),
    )(text_feat, w1, b1.reshape(1, proj_dim), w2, b2.reshape(1, proj_dim))


# --------------------------- replicate-and-store kernels ---------------------------

def _replicate_rows_kernel(y_ref, out_ref):
    """Sublane-dense fast path.

    y_ref:   (B, proj_dim)            VMEM (same block every grid step)
    out_ref: (1, TILE_ROWS, 128)      VMEM -- rows of 128 lanes for batch pl.program_id(0)
    """
    b = pl.program_id(0)
    reps = out_ref.shape[2] // y_ref.shape[1]          # 128 // proj_dim
    row = jnp.tile(y_ref[pl.ds(b, 1), :], (1, reps))   # one (1, 128) lane pattern
    # Sublane/row broadcast of the single replicated vreg over the whole block.
    out_ref[...] = jnp.broadcast_to(row[:, None, :], out_ref.shape).astype(out_ref.dtype)


def _replicate_lanes_kernel(y_ref, out_ref):
    """Lane-dense fallback (proj_dim does not divide 128).

    y_ref:   (B, proj_dim)
    out_ref: (B, TILE_P * proj_dim)
    """
    tile_p = out_ref.shape[1] // y_ref.shape[1]
    out_ref[...] = jnp.tile(y_ref[...], (1, tile_p)).astype(out_ref.dtype)


# --------------------------- wrapper ---------------------------

def garment_text_encoder_head(text_feat, w1, b1, w2, b2, num_points, *,
                              out_dtype=jnp.float32):
    """Projection head + repeat over num_points.

    text_feat: (B, text_dim) float32 CLS features (stand-in for CLIP output).
    returns:   (B, num_points, proj_dim) out_dtype
    """
    B, _ = text_feat.shape
    proj_dim = w2.shape[1]
    itemsize = jnp.dtype(out_dtype).itemsize
    sub = max(8, 32 // itemsize)                      # sublanes per vreg for out_dtype

    # 1) projection MLP computed once (hoisted out of the per-tile body).
    y = _project(text_feat, w1, b1, w2, b2)

    # Generation-aware VMEM budget / block-size target.
    try:
        phys_vmem = int(pltpu.get_tpu_info().vmem_capacity_bytes)
    except Exception:
        phys_vmem = 64 << 20                          # conservative (v7x physical)
    vmem_cap = int(phys_vmem * 0.55)
    target_block = (16 << 20) if phys_vmem > (80 << 20) else (8 << 20)

    total = num_points * proj_dim

    # ---------- fast path: sublane-dense rows of 128 lanes ----------
    if (128 % proj_dim == 0) and (total % 128 == 0):
        R = total // 128                              # output rows per batch element
        max_rows = max(sub, (target_block // (128 * itemsize) // sub) * sub)
        tile_rows = min(R, max_rows)
        if tile_rows != R:
            tile_rows = max(sub, (tile_rows // sub) * sub)
        n_row_tiles = pl.cdiv(R, tile_rows)
        # v7x (2 TCs): never collapse to a single grid step when the work allows it.
        if B * n_row_tiles < 2 and R > sub:
            tile_rows = max(sub, ((R // 2 + sub - 1) // sub) * sub)
            n_row_tiles = pl.cdiv(R, tile_rows)

        block_bytes = tile_rows * 128 * itemsize      # lane+sublane dense -> no padding
        vmem_limit = int(min(vmem_cap, max(16 << 20, 3 * block_bytes + (2 << 20))))

        out = pl.pallas_call(
            _replicate_rows_kernel,
            out_shape=jax.ShapeDtypeStruct((B, R, 128), out_dtype),
            grid_spec=pl.GridSpec(
                grid=(B, n_row_tiles),
                in_specs=[pl.BlockSpec((B, proj_dim), lambda b, r: (0, 0))],
                out_specs=pl.BlockSpec((1, tile_rows, 128), lambda b, r: (b, r, 0)),
            ),
            compiler_params=pltpu.CompilerParams(
                dimension_semantics=("parallel", "parallel"),
                vmem_limit_bytes=vmem_limit,
            ),
            cost_estimate=pl.CostEstimate(
                flops=0,
                transcendentals=0,
                bytes_accessed=B * total * itemsize + B * proj_dim * 4),
        )(y)
        return out.reshape(B, num_points, proj_dim)

    # ---------- fallback: lane-dense flattened (B, num_points*proj_dim) ----------
    unit = 128 // math.gcd(proj_dim, 128)             # smallest tile_p with width % 128 == 0
    pad_B = ((B + sub - 1) // sub) * sub              # sublane-padded rows per block
    fb_target = min(target_block, 4 << 20)            # cap: jnp.tile materializes the block
    max_p = max(1, fb_target // max(1, itemsize * proj_dim * pad_B))
    if max_p >= num_points:
        tile_p = num_points
    else:
        tile_p = min(num_points, max(unit, (max_p // unit) * unit))
    block_w = tile_p * proj_dim
    block_bytes = pad_B * block_w * itemsize
    vmem_limit = int(min(vmem_cap, max(16 << 20, 3 * block_bytes + (2 << 20))))

    out = pl.pallas_call(
        _replicate_lanes_kernel,
        out_shape=jax.ShapeDtypeStruct((B, num_points * proj_dim), out_dtype),
        grid_spec=pl.GridSpec(
            grid=(pl.cdiv(num_points, tile_p),),
            in_specs=[pl.BlockSpec((B, proj_dim), lambda p: (0, 0))],
            out_specs=pl.BlockSpec((B, block_w), lambda p: (0, p)),
        ),
        compiler_params=pltpu.CompilerParams(
            dimension_semantics=("parallel",),
            vmem_limit_bytes=vmem_limit,
        ),
        cost_estimate=pl.CostEstimate(
            flops=0,
            transcendentals=0,
            bytes_accessed=B * total * itemsize + B * proj_dim * 4),
    )(y)
    return out.reshape(B, num_points, proj_dim)


def init_params(key, text_dim, proj_dim):
    """Deterministic init matching nn.Linear(text_dim, proj_dim) -> nn.Linear(proj_dim, proj_dim)."""
    k1, k2, k3, k4 = jax.random.split(key, 4)
    lim1 = 1.0 / jnp.sqrt(text_dim)
    lim2 = 1.0 / jnp.sqrt(proj_dim)
    w1 = jax.random.uniform(k1, (text_dim, proj_dim), jnp.float32, -lim1, lim1)
    b1 = jax.random.uniform(k2, (proj_dim,), jnp.float32, -lim1, lim1)
    w2 = jax.random.uniform(k3, (proj_dim, proj_dim), jnp.float32, -lim2, lim2)
    b2 = jax.random.uniform(k4, (proj_dim,), jnp.float32, -lim2, lim2)
    return w1, b1, w2, b2


if __name__ == "__main__":
    # Small shapes consistent with the module: B=2 prompts, (reduced) text hidden
    # size 128, proj_dim=64, num_points=8.
    B = 2
    text_dim = 128
    proj_dim = 64
    num_points = 8

    key = jax.random.PRNGKey(0)
    k_feat, k_params = jax.random.split(key)

    # Synthetic CLS text features standing in for CLIP's last_hidden_state[:, 0, :].
    text_feat = jax.random.normal(k_feat, (B, text_dim), jnp.float32)
    w1, b1, w2, b2 = init_params(k_params, text_dim, proj_dim)

    out = garment_text_encoder_head(text_feat, w1, b1, w2, b2, num_points)
    out = jax.block_until_ready(out)

    # Reference in plain JAX (full-precision matmuls).
    hi = jax.lax.Precision.HIGHEST
    ref = jnp.maximum(jnp.dot(text_feat, w1, precision=hi) + b1, 0.0)
    ref = jnp.dot(ref, w2, precision=hi) + b2
    ref = jnp.broadcast_to(ref[:, None, :], (B, num_points, proj_dim))

    assert out.shape == (B, num_points, proj_dim)
    assert jnp.allclose(out, ref, atol=1e-4, rtol=1e-4)

    print("KERNEL_OK")
</pallas_src>

<mosaic_0001>
module attributes {stable_mosaic.version = 11 : i64} {
  func.func @_mlp_kernel(%arg0: memref<2x128xf32, #tpu.memory_space<vmem>>, %arg1: memref<128x64xf32, #tpu.memory_space<vmem>>, %arg2: memref<1x64xf32, #tpu.memory_space<vmem>>, %arg3: memref<64x64xf32, #tpu.memory_space<vmem>>, %arg4: memref<1x64xf32, #tpu.memory_space<vmem>>, %arg5: memref<2x64xf32, #tpu.memory_space<vmem>>) attributes {dimension_semantics = [], scalar_prefetch = 0 : i64, scratch_operands = 0 : i64, tpu.core_type = #tpu.core_type<tc>} {
    %c0 = arith.constant 0 : index
    %c0_0 = arith.constant 0 : index
    %0 = vector.load %arg0[%c0, %c0_0] : memref<2x128xf32, #tpu.memory_space<vmem>>, vector<2x128xf32>
    %c0_1 = arith.constant 0 : index
    %c0_2 = arith.constant 0 : index
    %1 = vector.load %arg1[%c0_1, %c0_2] : memref<128x64xf32, #tpu.memory_space<vmem>>, vector<128x64xf32>
    %cst = arith.constant dense<0.000000e+00> : vector<2x64xf32>
    %2 = tpu.matmul %0, %1, %cst {dimension_numbers = #tpu.dot_dimension_numbers<[1], [0], [0], [1], [0, 0, 1, 1], [], []>} : vector<2x128xf32>, vector<128x64xf32>, vector<2x64xf32> -> vector<2x64xf32>
    %c0_3 = arith.constant 0 : index
    %c0_4 = arith.constant 0 : index
    %3 = vector.load %arg2[%c0_3, %c0_4] : memref<1x64xf32, #tpu.memory_space<vmem>>, vector<1x64xf32>
    %4 = vector.broadcast %3 : vector<1x64xf32> to vector<2x64xf32>
    %5 = arith.addf %2, %4 : vector<2x64xf32>
    %cst_5 = arith.constant 0.000000e+00 : f32
    %6 = vector.broadcast %cst_5 : f32 to vector<2x64xf32>
    %7 = arith.maximumf %5, %6 : vector<2x64xf32>
    %c0_6 = arith.constant 0 : index
    %c0_7 = arith.constant 0 : index
    %8 = vector.load %arg3[%c0_6, %c0_7] : memref<64x64xf32, #tpu.memory_space<vmem>>, vector<64x64xf32>
    %cst_8 = arith.constant dense<0.000000e+00> : vector<2x64xf32>
    %9 = tpu.matmul %7, %8, %cst_8 {dimension_numbers = #tpu.dot_dimension_numbers<[1], [0], [0], [1], [0, 0, 1, 1], [], []>} : vector<2x64xf32>, vector<64x64xf32>, vector<2x64xf32> -> vector<2x64xf32>
    %c0_9 = arith.constant 0 : index
    %c0_10 = arith.constant 0 : index
    %10 = vector.load %arg4[%c0_9, %c0_10] : memref<1x64xf32, #tpu.memory_space<vmem>>, vector<1x64xf32>
    %11 = vector.broadcast %10 : vector<1x64xf32> to vector<2x64xf32>
    %12 = arith.addf %9, %11 : vector<2x64xf32>
    %c0_11 = arith.constant 0 : index
    %c0_12 = arith.constant 0 : index
    %13 = vector.load %arg5[%c0_11, %c0_12] : memref<2x64xf32, #tpu.memory_space<vmem>>, vector<2x64xf32>
    tpu.vector_store %arg5[%c0_11, %c0_12], %12 {strides = array<i32>} : memref<2x64xf32, #tpu.memory_space<vmem>>, vector<2x64xf32>,
    return
  }
}

</mosaic_0001>

<llo_original>
// kernel: tpu_custom_call.1
$region0: #{tpu_custom_call.1}
  #allocation0 [shape = 'u32[]', space=smem, size = 0x4, offset = 0x4, fixed_abs, tag = 'smem constant byte address 0x4 - core index']
  #allocation1 [shape = 'u32[144,128]{1,0:T(1,128)}', space=vmem, size = 0x12000, scoped, tag = 'internal scratch']
  %s0 = inlined_call_operand.vmem [shape: f32[2,128], index: 0, kind: input, shape index: {}]
  %s1 = inlined_call_operand.vmem [shape: f32[128,64], index: 1, kind: input, shape index: {}]
  %s2 = inlined_call_operand.vmem [shape: f32[1,64], index: 2, kind: input, shape index: {}]
  %s3 = inlined_call_operand.vmem [shape: f32[64,64], index: 3, kind: input, shape index: {}]
  %s4 = inlined_call_operand.vmem [shape: f32[1,64], index: 4, kind: input, shape index: {}]
  %s5 = inlined_call_operand.hbm [shape: f32[2,64], index: 5, kind: output, shape index: {}]
  %s6 = sld [smem:[#allocation0]]
  $region30: #{tpu_custom_call.1} parent=0
    _
  %s8 = ssub.s32 1, %s6
  %s9 = scalar_select 0, %s8, %s6
  $region1: #{tpu_custom_call.1} parent=0
    #allocation2 [shape = 'u8[1024]{0}', space=vmem, size = 0x400, scoped, tag = 'output window, operand 0, single buffered']
    #allocation3 [shape = 's32[1]{0}', space=sflag, size = 0x4, scoped, tag = 'scoped memory for tpu_custom_call.1']
    %10 = vsyncpa [#allocation3], 0
    // Predicated region
    $region2: #{tpu_custom_call.1} parent=1 // pred_check
      _
    $region3: #{tpu_custom_call.1} parent=1 // pred_check_branch
      %12 = sbr.rel (0) target = $region5
    $region4: #{tpu_custom_call.1} parent=1 // pred_region
      _
    $region5: #{tpu_custom_call.1} parent=1 // pred_fallthru
      _
    // Predicated region
    $region6: #{tpu_custom_call.1} parent=1 // pred_check
      _
    $region7: #{tpu_custom_call.1} parent=1 // pred_check_branch
      %14 = sbr.rel (0) target = $region9
    $region8: #{tpu_custom_call.1} parent=1 // pred_region
      _
    $region9: #{tpu_custom_call.1} parent=1 // pred_fallthru
      _
    // Predicated region
    $region10: #{tpu_custom_call.1} parent=1 // pred_check
      _
    $region11: #{tpu_custom_call.1} parent=1 // pred_check_branch
      %16 = sbr.rel (0) target = $region13
    $region12: #{tpu_custom_call.1} parent=1 // pred_region
      _
    $region13: #{tpu_custom_call.1} parent=1 // pred_fallthru
      _
    // Predicated region
    $region14: #{tpu_custom_call.1} parent=1 // pred_check
      _
    $region15: #{tpu_custom_call.1} parent=1 // pred_check_branch
      %18 = sbr.rel (0) target = $region17
    $region16: #{tpu_custom_call.1} parent=1 // pred_region
      _
    $region17: #{tpu_custom_call.1} parent=1 // pred_fallthru
      _
    // Predicated region
    $region18: #{tpu_custom_call.1} parent=1 // pred_check
      _
    $region19: #{tpu_custom_call.1} parent=1 // pred_check_branch
      %20 = sbr.rel (0) target = $region21
    $region20: #{tpu_custom_call.1} parent=1 // pred_region
      _
    $region21: #{tpu_custom_call.1} parent=1 // pred_fallthru
      _
    %v21 = vld [vmem:[%s0] sm:$0x3]
    %v22 = vld [vmem:[%s1] sm:$0xff]
    %v23 = vld [vmem:[%s1 + $0x8] sm:$0xff]
    %v24 = vld [vmem:[%s1 + $0x10] sm:$0xff]
    %v25 = vld [vmem:[%s1 + $0x18] sm:$0xff]
    %v26 = vld [vmem:[%s1 + $0x20] sm:$0xff]
    %v27 = vld [vmem:[%s1 + $0x28] sm:$0xff]
    %v28 = vld [vmem:[%s1 + $0x30] sm:$0xff]
    %v29 = vld [vmem:[%s1 + $0x38] sm:$0xff]
    %v30 = vld [vmem:[%s1 + $0x40] sm:$0xff]
    %v31 = vld [vmem:[%s1 + $0x48] sm:$0xff]
    %v32 = vld [vmem:[%s1 + $0x50] sm:$0xff]
    %v33 = vld [vmem:[%s1 + $0x58] sm:$0xff]
    %v34 = vld [vmem:[%s1 + $0x60] sm:$0xff]
    %v35 = vld [vmem:[%s1 + $0x68] sm:$0xff]
    %v36 = vld [vmem:[%s1 + $0x70] sm:$0xff]
    %v37 = vld [vmem:[%s1 + $0x78] sm:$0xff]
    %v38 = vld [vmem:[%s2] sm:$0x1]
    %v40 = vlaneseq
    %v41 = vshrl.u32 %v40, 7
    %v42 = vsub.s32 0, %v41
    %v43 = vrot.slane %v38, %v42
    %45 = vmatprep.subr.mxu0 0.0
    %46 = vmatpush1.msra.mxu0 %v22
    %47 = vmatprep.subr.mxu0 0.0
    %48 = vmatpush1.msra.mxu0 %v23
    %49 = vmatprep.subr.mxu0 0.0
    %50 = vmatpush1.msra.mxu0 %v24
    %51 = vmatprep.subr.mxu0 0.0
    %52 = vmatpush1.msra.mxu0 %v25
    %53 = vmatprep.subr.mxu0 0.0
    %54 = vmatpush1.msra.mxu0 %v26
    %55 = vmatprep.subr.mxu0 0.0
    %56 = vmatpush1.msra.mxu0 %v27
    %57 = vmatprep.subr.mxu0 0.0
    %58 = vmatpush1.msra.mxu0 %v28
    %59 = vmatprep.subr.mxu0 0.0
    %60 = vmatpush1.msra.mxu0 %v29
    %61 = vmatprep.subr.mxu0 0.0
    %62 = vmatpush1.msra.mxu0 %v30
    %63 = vmatprep.subr.mxu0 0.0
    %64 = vmatpush1.msra.mxu0 %v31
    %65 = vmatprep.subr.mxu0 0.0
    %66 = vmatpush1.msra.mxu0 %v32
    %67 = vmatprep.subr.mxu0 0.0
    %68 = vmatpush1.msra.mxu0 %v33
    %69 = vmatprep.subr.mxu0 0.0
    %70 = vmatpush1.msra.mxu0 %v34
    %71 = vmatprep.subr.mxu0 0.0
    %72 = vmatpush1.msra.mxu0 %v35
    %73 = vmatprep.subr.mxu0 0.0
    %74 = vmatpush1.msra.mxu0 %v36
    %75 = vmatprep.subr.mxu0 0.0
    %76 = vmatpush1.msra.mxu0 %v37
    %77 = vmatprep.subr.mxu0 0.0
    %78 = vmatpush1.msra.mxu0 0.0
    %79 = vmatprep.subr.mxu0 0.0
    %80 = vmatpush1.msra.mxu0 0.0
    %81 = vmatprep.subr.mxu0 0.0
    %82 = vmatpush1.msra.mxu0 0.0
    %83 = vmatprep.subr.mxu0 0.0
    %84 = vmatpush1.msra.mxu0 0.0
    %85 = vmatprep.subr.mxu0 0.0
    %86 = vmatpush1.msra.mxu0 0.0
    %87 = vmatprep.subr.mxu0 0.0
    %88 = vmatpush1.msra.mxu0 0.0
    %89 = vmatprep.subr.mxu0 0.0
    %90 = vmatpush1.msra.mxu0 0.0
    %91 = vmatprep.subr.mxu0 0.0
    %92 = vmatpush1.msra.mxu0 0.0
    %93 = vmatprep.subr.mxu0 0.0
    %94 = vmatpush1.msra.mxu0 0.0
    %95 = vmatprep.subr.mxu0 0.0
    %96 = vmatpush1.msra.mxu0 0.0
    %97 = vmatprep.subr.mxu0 0.0
    %98 = vmatpush1.msra.mxu0 0.0
    %99 = vmatprep.subr.mxu0 0.0
    %100 = vmatpush1.msra.mxu0 0.0
    %101 = vmatprep.subr.mxu0 0.0
    %102 = vmatpush1.msra.mxu0 0.0
    %103 = vmatprep.subr.mxu0 0.0
    %104 = vmatpush1.msra.mxu0 0.0
    %105 = vmatprep.subr.mxu0 0.0
    %106 = vmatpush1.msra.mxu0 0.0
    %107 = vmatprep.subr.mxu0 0.0
    %108 = vmatpush1.msra.mxu0 0.0
    %109 = vmatprep.mubr.f32.mxu0 0.0
    %110 = vmatmul.mubr.f32.gmra.mrb[0].mxu0 %v21
    %v111 = vpop.f32.mrb[0].mxu0
    %v112 = vadd.f32 %v43, %v111
    %v113 = vpop.f32.mrb[0].mxu0
    %114 = vdwg.mxu0
    %v115 = vmax.f32 %v112, 0.0
    %v116 = vld [vmem:[%s3] sm:$0xff]
    %v117 = vld [vmem:[%s3 + $0x8] sm:$0xff]
    %v118 = vld [vmem:[%s3 + $0x10] sm:$0xff]
    %v119 = vld [vmem:[%s3 + $0x18] sm:$0xff]
    %v120 = vld [vmem:[%s3 + $0x20] sm:$0xff]
    %v121 = vld [vmem:[%s3 + $0x28] sm:$0xff]
    %v122 = vld [vmem:[%s3 + $0x30] sm:$0xff]
    %v123 = vld [vmem:[%s3 + $0x38] sm:$0xff]
    %v124 = vld [vmem:[%s4] sm:$0x1]
    %v126 = vlaneseq
    %v127 = vshrl.u32 %v126, 7
    %v128 = vsub.s32 0, %v127
    %v129 = vrot.slane %v124, %v128
    %vm131 = vcmask 523264
    %v133 = vsel %vm131, %v115, 0
    %135 = vmatprep.subr.mxu0 0.0
    %136 = vmatpush1.msra.mxu0 %v116
    %137 = vmatprep.subr.mxu0 0.0
    %138 = vmatpush1.msra.mxu0 %v117
    %139 = vmatprep.subr.mxu0 0.0
    %140 = vmatpush1.msra.mxu0 %v118
    %141 = vmatprep.subr.mxu0 0.0
    %142 = vmatpush1.msra.mxu0 %v119
    %143 = vmatprep.subr.mxu0 0.0
    %144 = vmatpush1.msra.mxu0 %v120
    %145 = vmatprep.subr.mxu0 0.0
    %146 = vmatpush1.msra.mxu0 %v121
    %147 = vmatprep.subr.mxu0 0.0
    %148 = vmatpush1.msra.mxu0 %v122
    %149 = vmatprep.subr.mxu0 0.0
    %150 = vmatpush1.msra.mxu0 %v123
    %151 = vmatprep.subr.mxu0 0.0
    %152 = vmatpush1.msra.mxu0 0.0
    %153 = vmatprep.subr.mxu0 0.0
    %154 = vmatpush1.msra.mxu0 0.0
    %155 = vmatprep.subr.mxu0 0.0
    %156 = vmatpush1.msra.mxu0 0.0
    %157 = vmatprep.subr.mxu0 0.0
    %158 = vmatpush1.msra.mxu0 0.0
    %159 = vmatprep.subr.mxu0 0.0
    %160 = vmatpush1.msra.mxu0 0.0
    %161 = vmatprep.subr.mxu0 0.0
    %162 = vmatpush1.msra.mxu0 0.0
    %163 = vmatprep.subr.mxu0 0.0
    %164 = vmatpush1.msra.mxu0 0.0
    %165 = vmatprep.subr.mxu0 0.0
    %166 = vmatpush1.msra.mxu0 0.0
    %167 = vmatprep.subr.mxu0 0.0
    %168 = vmatpush1.msra.mxu0 0.0
    %169 = vmatprep.subr.mxu0 0.0
    %170 = vmatpush1.msra.mxu0 0.0
    %171 = vmatprep.subr.mxu0 0.0
    %172 = vmatpush1.msra.mxu0 0.0
    %173 = vmatprep.subr.mxu0 0.0
    %174 = vmatpush1.msra.mxu0 0.0
    %175 = vmatprep.subr.mxu0 0.0
    %176 = vmatpush1.msra.mxu0 0.0
    %177 = vmatprep.subr.mxu0 0.0
    %178 = vmatpush1.msra.mxu0 0.0
    %179 = vmatprep.subr.mxu0 0.0
    %180 = vmatpush1.msra.mxu0 0.0
    %181 = vmatprep.subr.mxu0 0.0
    %182 = vmatpush1.msra.mxu0 0.0
    %183 = vmatprep.subr.mxu0 0.0
    %184 = vmatpush1.msra.mxu0 0.0
    %185 = vmatprep.subr.mxu0 0.0
    %186 = vmatpush1.msra.mxu0 0.0
    %187 = vmatprep.subr.mxu0 0.0
    %188 = vmatpush1.msra.mxu0 0.0
    %189 = vmatprep.subr.mxu0 0.0
    %190 = vmatpush1.msra.mxu0 0.0
    %191 = vmatprep.subr.mxu0 0.0
    %192 = vmatpush1.msra.mxu0 0.0
    %193 = vmatprep.subr.mxu0 0.0
    %194 = vmatpush1.msra.mxu0 0.0
    %195 = vmatprep.subr.mxu0 0.0
    %196 = vmatpush1.msra.mxu0 0.0
    %197 = vmatprep.subr.mxu0 0.0
    %198 = vmatpush1.msra.mxu0 0.0
    %199 = vmatprep.mubr.f32.mxu0 0.0
    %200 = vmatmul.mubr.f32.gmra.mrb[0].mxu0 %v133
    %v201 = vpop.f32.mrb[0].mxu0
    %v202 = vadd.f32 %v129, %v201
    %v203 = vpop.f32.mrb[0].mxu0
    %204 = vdwg.mxu0
    %vm205 = vcmask 517120
    %206 = vst.msk [vmem:[#allocation2] sm:$0x3] %vm205, %v202
    // Predicated region
    $region22: #{tpu_custom_call.1} parent=1 // pred_check
      _
    $region23: #{tpu_custom_call.1} parent=1 // pred_check_branch
      %208 = sbr.rel (0) target = $region25
    $region24: #{tpu_custom_call.1} parent=1 // pred_region
      %s210 = ssub.s32 32, 32
      %211 = vsyncadd [#allocation3], %s210
      %s213 = sshll.u32 [#allocation2], 4
      %s214 = int_to_ptr.vmem [resolvable:$true] %s213
      %216 = dma.vmem_to_hbm [thread:$0]  %s214, 32, %s5, [#allocation3]
    $region25: #{tpu_custom_call.1} parent=1 // pred_fallthru
      _
    // Predicated region
    $region26: #{tpu_custom_call.1} parent=1 // pred_check
      _
    $region27: #{tpu_custom_call.1} parent=1 // pred_check_branch
      %218 = sbr.rel (0) target = $region29
    $region28: #{tpu_custom_call.1} parent=1 // pred_region
      %219 = dma.done [#allocation3], 32
    $region29: #{tpu_custom_call.1} parent=1 // pred_fallthru
      _
    %220 = vsyncpa [#allocation3], 1

</llo_original>
